<compile_context>
chip_gen: v6e
topology: v6e:2x2x1
jax: 0.10.0
libtpu: 0.0.40
codegen_flags: <defaults>
</compile_context>

<pallas_src>
import jax
import jax.numpy as jnp
from jax.experimental import pallas as pl
from jax.experimental.pallas import tpu as pltpu

_LANE = 128
_SUBLANE_BF16 = 16  # bf16 packs 16 rows per vreg sublane group


def _round_up(x: int, m: int) -> int:
    return ((x + m - 1) // m) * m


def _pad2d(a, rows: int, cols: int):
    pr, pc = rows - a.shape[0], cols - a.shape[1]
    if pr or pc:
        a = jnp.pad(a, ((0, pr), (0, pc)))
    return a


def _vmem_capacity_bytes() -> int:
    try:
        return int(pltpu.get_tpu_info().vmem_capacity_bytes)
    except Exception:
        # Conservative default: v7x has the smallest per-TC VMEM (64 MiB).
        return 64 * 1024 * 1024


def _mlp_kernel(x_ref, w1t_ref, b1_ref, w2t_ref, b2_ref, o_ref, acc_ref):
    j = pl.program_id(1)

    @pl.when(j == 0)
    def _():
        acc_ref[...] = jnp.zeros_like(acc_ref)

    # fc1 chunk: (TM, d) @ (d, TH), f32 accumulation on the MXU.
    h = jnp.dot(x_ref[...], w1t_ref[...], preferred_element_type=jnp.float32)
    # Bias add + SiLU in f32 (padded hidden columns: bias 0 -> silu(0) = 0),
    # with the bf16 downcast fused into the multiply result.
    h = h + b1_ref[...].astype(jnp.float32)
    act = (h * jax.nn.sigmoid(h)).astype(w2t_ref.dtype)
    # fc2 partial product, accumulated over hidden chunks in f32.
    acc_ref[...] += jnp.dot(act, w2t_ref[...], preferred_element_type=jnp.float32)

    @pl.when(j == pl.num_programs(1) - 1)
    def _():
        o_ref[...] = (acc_ref[...] + b2_ref[...].astype(jnp.float32)).astype(o_ref.dtype)


def mlp_pallas(x, w1, b1, w2, b2, *, tm=None, compute_dtype=jnp.bfloat16):
    """x: (..., d_model); w1: (4d, d), b1: (4d,), w2: (d, 4d), b2: (d,)."""
    orig_shape = x.shape
    out_dtype = x.dtype
    d_model = orig_shape[-1]
    d_hidden = w1.shape[0]

    x2d = x.reshape(-1, d_model)
    M = x2d.shape[0]

    in_itemsize = jnp.dtype(compute_dtype).itemsize
    out_itemsize = jnp.dtype(out_dtype).itemsize

    # Lane-dense feature dims (multiples of 128; zero padding is exact).
    d_model_p = _round_up(d_model, _LANE)
    d_hidden_p = _round_up(d_hidden, _LANE)

    # ----- per-generation VMEM budget -----------------------------------
    vmem_cap = _vmem_capacity_bytes()
    vmem_limit = max(32 << 20, min(int(vmem_cap * 0.85), vmem_cap - (8 << 20)))
    budget = int(vmem_limit * 0.9)  # headroom for compiler scratch / sems

    # ----- row tile (multiple of 16 for bf16 packing) --------------------
    if tm is None:
        tm = 512 if vmem_cap >= (96 << 20) else 256  # v5e/v6e vs v7x
    tm = max(_SUBLANE_BF16, _round_up(min(tm, max(M, 1)), _SUBLANE_BF16))
    # v7x megacore: guarantee >= 2 row tiles when M allows, so the "parallel"
    # axis can shard across both TensorCores.
    if pl.cdiv(M, tm) < 2 and M > _SUBLANE_BF16:
        tm = max(_SUBLANE_BF16, _round_up(pl.cdiv(M, 2), _SUBLANE_BF16))

    # ----- hidden-dim split so all buffers fit in VMEM -------------------
    def vmem_bytes(tm_, th_, n_h_):
        w_buf = 1 if n_h_ == 1 else 2  # weight chunks double-buffer only if they rotate
        return (2 * tm_ * d_model_p * in_itemsize          # x (double-buffered)
                + 2 * tm_ * d_model_p * out_itemsize       # out (double-buffered)
                + w_buf * d_model_p * th_ * in_itemsize    # w1t chunk
                + w_buf * th_ * d_model_p * in_itemsize    # w2t chunk
                + w_buf * th_ * 4 + d_model_p * 4          # b1 chunk + b2
                + tm_ * d_model_p * 4                      # f32 accumulator scratch
                + tm_ * th_ * (4 + in_itemsize))           # live h (f32) + act (bf16)

    n_h, th = 1, d_hidden_p
    while vmem_bytes(tm, th, n_h) > budget and th > _LANE:
        n_h += 1
        th = _round_up(pl.cdiv(d_hidden_p, n_h), _LANE)
    while vmem_bytes(tm, th, n_h) > budget and tm > _SUBLANE_BF16:
        tm = max(_SUBLANE_BF16, _round_up(tm // 2, _SUBLANE_BF16))
    d_hidden_pad = th * n_h
    n_row = pl.cdiv(M, tm)

    # ----- wrapper glue (skipped when already aligned) --------------------
    # TODO(synk): in production store weights pre-transposed / pre-cast so the
    # pad/transpose/cast below (a separate HBM round trip) disappears.
    if d_model_p == d_model and x2d.dtype == compute_dtype:
        x_p = x2d
    else:
        x_p = _pad2d(x2d, M, d_model_p).astype(compute_dtype)
    w1t = _pad2d(w1.T, d_model_p, d_hidden_pad).astype(compute_dtype)   # (d, 4d)
    w2t = _pad2d(w2.T, d_hidden_pad, d_model_p).astype(compute_dtype)   # (4d, d)
    b1r = _pad2d(b1.reshape(1, -1), 1, d_hidden_pad).astype(jnp.float32)
    b2r = _pad2d(b2.reshape(1, -1), 1, d_model_p).astype(jnp.float32)

    weight_bytes = 2 * d_model_p * d_hidden_pad * in_itemsize
    weight_passes = 1 if n_h == 1 else n_row  # chunks re-fetched per row tile
    cost = pl.CostEstimate(
        flops=4 * M * d_model_p * d_hidden_pad,
        transcendentals=M * d_hidden_pad,
        bytes_accessed=(M * d_model_p * (in_itemsize + out_itemsize)
                        + weight_passes * weight_bytes
                        + (d_hidden_pad + d_model_p) * 4),
    )

    def build(single_buffer_consts: bool):
        def spec(shape, imap, constant):
            if single_buffer_consts and constant:
                # Constant block index -> fetched once; one buffer is enough.
                return pl.BlockSpec(shape, imap, pipeline_mode=pl.Buffered(1))
            return pl.BlockSpec(shape, imap)

        w_const = (n_h == 1)  # weight chunks never rotate when n_h == 1
        grid_spec = pltpu.PrefetchScalarGridSpec(
            num_scalar_prefetch=0,
            grid=(n_row, n_h),  # reduction (hidden) axis last
            in_specs=[
                spec((tm, d_model_p), lambda i, j: (i, 0), False),       # x
                spec((d_model_p, th), lambda i, j: (0, j), w_const),     # w1t
                spec((1, th),         lambda i, j: (0, j), w_const),     # b1
                spec((th, d_model_p), lambda i, j: (j, 0), w_const),     # w2t
                spec((1, d_model_p),  lambda i, j: (0, 0), True),        # b2
            ],
            out_specs=pl.BlockSpec((tm, d_model_p), lambda i, j: (i, 0)),
            scratch_shapes=[pltpu.VMEM((tm, d_model_p), jnp.float32)],
        )
        return pl.pallas_call(
            _mlp_kernel,
            out_shape=jax.ShapeDtypeStruct((M, d_model_p), out_dtype),
            grid_spec=grid_spec,
            compiler_params=pltpu.CompilerParams(
                dimension_semantics=("parallel", "arbitrary"),
                vmem_limit_bytes=vmem_limit,
            ),
            cost_estimate=cost,
        )

    try:
        out = jax.block_until_ready(build(True)(x_p, w1t, b1r, w2t, b2r))
    except Exception:
        # pl.Buffered(1) not accepted by this JAX/Mosaic build -> fall back to
        # default double-buffered specs (identical results, a bit more VMEM).
        out = build(False)(x_p, w1t, b1r, w2t, b2r)

    if d_model_p != d_model:
        out = out[:, :d_model]
    return out.reshape(orig_shape)


def mlp_ref(x, w1, b1, w2, b2):
    h = x @ w1.T + b1
    h = h * jax.nn.sigmoid(h)
    return h @ w2.T + b2


if __name__ == "__main__":
    key = jax.random.PRNGKey(0)
    batch, seq, d_model = 2, 8, 32
    d_hidden = 4 * d_model

    kx, k1, k2, k3, k4 = jax.random.split(key, 5)
    x = jax.random.normal(kx, (batch, seq, d_model), dtype=jnp.float32)

    # Deterministic parameter init (matches nn.Linear shapes).
    scale1 = 1.0 / jnp.sqrt(d_model)
    scale2 = 1.0 / jnp.sqrt(d_hidden)
    w1 = jax.random.uniform(k1, (d_hidden, d_model), jnp.float32, -scale1, scale1)
    b1 = jax.random.uniform(k2, (d_hidden,), jnp.float32, -scale1, scale1)
    w2 = jax.random.uniform(k3, (d_model, d_hidden), jnp.float32, -scale2, scale2)
    b2 = jax.random.uniform(k4, (d_model,), jnp.float32, -scale2, scale2)

    out = mlp_pallas(x, w1, b1, w2, b2)
    out = jax.block_until_ready(out)

    ref = mlp_ref(x, w1, b1, w2, b2)
    assert out.shape == (batch, seq, d_model)
    # bf16 matmul operands with f32 accumulation -> loose-ish tolerance vs f32 ref.
    assert jnp.allclose(out, ref, atol=3e-2, rtol=3e-2), "mismatch vs reference"

    print("KERNEL_OK")
</pallas_src>

<mosaic_0001>
module attributes {stable_mosaic.version = 11 : i64} {
  func.func @_mlp_kernel(%arg0: i32, %arg1: i32, %arg2: memref<16x128xbf16, #tpu.memory_space<vmem>>, %arg3: memref<128x128xbf16, #tpu.memory_space<vmem>>, %arg4: memref<1x128xf32, #tpu.memory_space<vmem>>, %arg5: memref<128x128xbf16, #tpu.memory_space<vmem>>, %arg6: memref<1x128xf32, #tpu.memory_space<vmem>>, %arg7: memref<16x128xf32, #tpu.memory_space<vmem>>, %arg8: memref<16x128xf32, #tpu.memory_space<vmem>>) attributes {dimension_semantics = [#tpu.dimension_semantics<parallel>, #tpu.dimension_semantics<arbitrary>], iteration_bounds = array<i64: 1, 1>, scalar_prefetch = 0 : i64, scratch_operands = 1 : i64, tpu.core_type = #tpu.core_type<tc>, window_params = [{transform_indices = @transform_0, window_bounds = array<i64: 16, 128>}, {pipeline_mode = #tpu.pipeline_mode<synchronous>, transform_indices = @transform_1, window_bounds = array<i64: 128, 128>}, {pipeline_mode = #tpu.pipeline_mode<synchronous>, transform_indices = @transform_2, window_bounds = array<i64: 1, 128>}, {pipeline_mode = #tpu.pipeline_mode<synchronous>, transform_indices = @transform_3, window_bounds = array<i64: 128, 128>}, {pipeline_mode = #tpu.pipeline_mode<synchronous>, transform_indices = @transform_4, window_bounds = array<i64: 1, 128>}, {transform_indices = @transform_5, window_bounds = array<i64: 16, 128>}]} {
    %c0_i32 = arith.constant 0 : i32
    %0 = arith.cmpi eq, %arg1, %c0_i32 : i32
    %1 = arith.extui %0 : i1 to i32
    %c0_i32_0 = arith.constant 0 : i32
    %2 = arith.cmpi ne, %1, %c0_i32_0 : i32
    scf.if %2 {
      %cst_16 = arith.constant 0.000000e+00 : f32
      %24 = vector.broadcast %cst_16 : f32 to vector<16x128xf32>
      %c0_17 = arith.constant 0 : index
      %c0_18 = arith.constant 0 : index
      %25 = vector.load %arg8[%c0_17, %c0_18] : memref<16x128xf32, #tpu.memory_space<vmem>>, vector<16x128xf32>
      tpu.vector_store %arg8[%c0_17, %c0_18], %24 {strides = array<i32>} : memref<16x128xf32, #tpu.memory_space<vmem>>, vector<16x128xf32>,
    } else {
    }
    %c0 = arith.constant 0 : index
    %c0_1 = arith.constant 0 : index
    %3 = vector.load %arg2[%c0, %c0_1] : memref<16x128xbf16, #tpu.memory_space<vmem>>, vector<16x128xbf16>
    %c0_2 = arith.constant 0 : index
    %c0_3 = arith.constant 0 : index
    %4 = vector.load %arg3[%c0_2, %c0_3] : memref<128x128xbf16, #tpu.memory_space<vmem>>, vector<128x128xbf16>
    %cst = arith.constant dense<0.000000e+00> : vector<16x128xf32>
    %5 = tpu.matmul %3, %4, %cst {dimension_numbers = #tpu.dot_dimension_numbers<[1], [0], [0], [1], [0, 0, 1, 1], [], []>} : vector<16x128xbf16>, vector<128x128xbf16>, vector<16x128xf32> -> vector<16x128xf32>
    %c0_4 = arith.constant 0 : index
    %c0_5 = arith.constant 0 : index
    %6 = vector.load %arg4[%c0_4, %c0_5] : memref<1x128xf32, #tpu.memory_space<vmem>>, vector<1x128xf32>
    %7 = vector.broadcast %6 : vector<1x128xf32> to vector<16x128xf32>
    %8 = arith.addf %5, %7 : vector<16x128xf32>
    %9 = arith.negf %8 : vector<16x128xf32>
    %10 = math.exp %9 : vector<16x128xf32>
    %cst_6 = arith.constant 1.000000e+00 : f32
    %11 = vector.broadcast %cst_6 : f32 to vector<16x128xf32>
    %12 = arith.addf %11, %10 : vector<16x128xf32>
    %13 = arith.divf %11, %12 : vector<16x128xf32>
    %14 = arith.mulf %8, %13 : vector<16x128xf32>
    %15 = arith.truncf %14 : vector<16x128xf32> to vector<16x128xbf16>
    %c0_7 = arith.constant 0 : index
    %c0_8 = arith.constant 0 : index
    %16 = vector.load %arg8[%c0_7, %c0_8] : memref<16x128xf32, #tpu.memory_space<vmem>>, vector<16x128xf32>
    %c0_9 = arith.constant 0 : index
    %c0_10 = arith.constant 0 : index
    %17 = vector.load %arg5[%c0_9, %c0_10] : memref<128x128xbf16, #tpu.memory_space<vmem>>, vector<128x128xbf16>
    %cst_11 = arith.constant dense<0.000000e+00> : vector<16x128xf32>
    %18 = tpu.matmul %15, %17, %cst_11 {dimension_numbers = #tpu.dot_dimension_numbers<[1], [0], [0], [1], [0, 0, 1, 1], [], []>} : vector<16x128xbf16>, vector<128x128xbf16>, vector<16x128xf32> -> vector<16x128xf32>
    %19 = arith.addf %16, %18 : vector<16x128xf32>
    %c0_12 = arith.constant 0 : index
    %c0_13 = arith.constant 0 : index
    %20 = vector.load %arg8[%c0_12, %c0_13] : memref<16x128xf32, #tpu.memory_space<vmem>>, vector<16x128xf32>
    tpu.vector_store %arg8[%c0_12, %c0_13], %19 {strides = array<i32>} : memref<16x128xf32, #tpu.memory_space<vmem>>, vector<16x128xf32>,
    %c0_i32_14 = arith.constant 0 : i32
    %21 = arith.cmpi eq, %arg1, %c0_i32_14 : i32
    %22 = arith.extui %21 : i1 to i32
    %c0_i32_15 = arith.constant 0 : i32
    %23 = arith.cmpi ne, %22, %c0_i32_15 : i32
    scf.if %23 {
      %c0_16 = arith.constant 0 : index
      %c0_17 = arith.constant 0 : index
      %24 = vector.load %arg8[%c0_16, %c0_17] : memref<16x128xf32, #tpu.memory_space<vmem>>, vector<16x128xf32>
      %c0_18 = arith.constant 0 : index
      %c0_19 = arith.constant 0 : index
      %25 = vector.load %arg6[%c0_18, %c0_19] : memref<1x128xf32, #tpu.memory_space<vmem>>, vector<1x128xf32>
      %26 = vector.broadcast %25 : vector<1x128xf32> to vector<16x128xf32>
      %27 = arith.addf %24, %26 : vector<16x128xf32>
      %c0_20 = arith.constant 0 : index
      %c0_21 = arith.constant 0 : index
      %28 = vector.load %arg7[%c0_20, %c0_21] : memref<16x128xf32, #tpu.memory_space<vmem>>, vector<16x128xf32>
      tpu.vector_store %arg7[%c0_20, %c0_21], %27 {strides = array<i32>} : memref<16x128xf32, #tpu.memory_space<vmem>>, vector<16x128xf32>,
    } else {
    }
    return
  }
  func.func @transform_0(%arg0: i32, %arg1: i32) -> (i32, i32) {
    %c0_i32 = arith.constant 0 : i32
    %c0_i32_0 = arith.constant 0 : i32
    return %arg0, %c0_i32 : i32, i32
  }
  func.func @transform_1(%arg0: i32, %arg1: i32) -> (i32, i32) {
    %c0_i32 = arith.constant 0 : i32
    %c0_i32_0 = arith.constant 0 : i32
    return %c0_i32, %arg1 : i32, i32
  }
  func.func @transform_2(%arg0: i32, %arg1: i32) -> (i32, i32) {
    %c0_i32 = arith.constant 0 : i32
    %c0_i32_0 = arith.constant 0 : i32
    return %c0_i32, %arg1 : i32, i32
  }
  func.func @transform_3(%arg0: i32, %arg1: i32) -> (i32, i32) {
    %c0_i32 = arith.constant 0 : i32
    %c0_i32_0 = arith.constant 0 : i32
    return %arg1, %c0_i32 : i32, i32
  }
  func.func @transform_4(%arg0: i32, %arg1: i32) -> (i32, i32) {
    %c0_i32 = arith.constant 0 : i32
    %c0_i32_0 = arith.constant 0 : i32
    %c0_i32_1 = arith.constant 0 : i32
    return %c0_i32, %c0_i32_0 : i32, i32
  }
  func.func @transform_5(%arg0: i32, %arg1: i32) -> (i32, i32) {
    %c0_i32 = arith.constant 0 : i32
    %c0_i32_0 = arith.constant 0 : i32
    return %arg0, %c0_i32 : i32, i32
  }
}

module attributes {stable_mosaic.version = 11 : i64} {
  func.func @_mlp_kernel(%arg0: i32, %arg1: i32, %arg2: memref<16x128xbf16, #tpu.memory_space<vmem>>, %arg3: memref<128x128xbf16, #tpu.memory_space<vmem>>, %arg4: memref<1x128xf32, #tpu.memory_space<vmem>>, %arg5: memref<128x128xbf16, #tpu.memory_space<vmem>>, %arg6: memref<1x128xf32, #tpu.memory_space<vmem>>, %arg7: memref<16x128xf32, #tpu.memory_space<vmem>>, %arg8: memref<16x128xf32, #tpu.memory_space<vmem>>) attributes {dimension_semantics = [#tpu.dimension_semantics<parallel>, #tpu.dimension_semantics<arbitrary>], iteration_bounds = array<i64: 1, 1>, scalar_prefetch = 0 : i64, scratch_operands = 1 : i64, tpu.core_type = #tpu.core_type<tc>, window_params = [{transform_indices = @transform_0, window_bounds = array<i64: 16, 128>}, {transform_indices = @transform_1, window_bounds = array<i64: 128, 128>}, {transform_indices = @transform_2, window_bounds = array<i64: 1, 128>}, {transform_indices = @transform_3, window_bounds = array<i64: 128, 128>}, {pipeline_mode = #tpu.pipeline_mode<synchronous>, transform_indices = @transform_4, window_bounds = array<i64: 1, 128>}, {transform_indices = @transform_5, window_bounds = array<i64: 16, 128>}]} {
    %c0_i32 = arith.constant 0 : i32
    %0 = arith.cmpi eq, %arg1, %c0_i32 : i32
    %1 = arith.extui %0 : i1 to i32
    %c0_i32_0 = arith.constant 0 : i32
    %2 = arith.cmpi ne, %1, %c0_i32_0 : i32
    scf.if %2 {
      %cst_16 = arith.constant 0.000000e+00 : f32
      %24 = vector.broadcast %cst_16 : f32 to vector<16x128xf32>
      %c0_17 = arith.constant 0 : index
      %c0_18 = arith.constant 0 : index
      %25 = vector.load %arg8[%c0_17, %c0_18] : memref<16x128xf32, #tpu.memory_space<vmem>>, vector<16x128xf32>
      tpu.vector_store %arg8[%c0_17, %c0_18], %24 {strides = array<i32>} : memref<16x128xf32, #tpu.memory_space<vmem>>, vector<16x128xf32>,
    } else {
    }
    %c0 = arith.constant 0 : index
    %c0_1 = arith.constant 0 : index
    %3 = vector.load %arg2[%c0, %c0_1] : memref<16x128xbf16, #tpu.memory_space<vmem>>, vector<16x128xbf16>
    %c0_2 = arith.constant 0 : index
    %c0_3 = arith.constant 0 : index
    %4 = vector.load %arg3[%c0_2, %c0_3] : memref<128x128xbf16, #tpu.memory_space<vmem>>, vector<128x128xbf16>
    %cst = arith.constant dense<0.000000e+00> : vector<16x128xf32>
    %5 = tpu.matmul %3, %4, %cst {dimension_numbers = #tpu.dot_dimension_numbers<[1], [0], [0], [1], [0, 0, 1, 1], [], []>} : vector<16x128xbf16>, vector<128x128xbf16>, vector<16x128xf32> -> vector<16x128xf32>
    %c0_4 = arith.constant 0 : index
    %c0_5 = arith.constant 0 : index
    %6 = vector.load %arg4[%c0_4, %c0_5] : memref<1x128xf32, #tpu.memory_space<vmem>>, vector<1x128xf32>
    %7 = vector.broadcast %6 : vector<1x128xf32> to vector<16x128xf32>
    %8 = arith.addf %5, %7 : vector<16x128xf32>
    %9 = arith.negf %8 : vector<16x128xf32>
    %10 = math.exp %9 : vector<16x128xf32>
    %cst_6 = arith.constant 1.000000e+00 : f32
    %11 = vector.broadcast %cst_6 : f32 to vector<16x128xf32>
    %12 = arith.addf %11, %10 : vector<16x128xf32>
    %13 = arith.divf %11, %12 : vector<16x128xf32>
    %14 = arith.mulf %8, %13 : vector<16x128xf32>
    %15 = arith.truncf %14 : vector<16x128xf32> to vector<16x128xbf16>
    %c0_7 = arith.constant 0 : index
    %c0_8 = arith.constant 0 : index
    %16 = vector.load %arg8[%c0_7, %c0_8] : memref<16x128xf32, #tpu.memory_space<vmem>>, vector<16x128xf32>
    %c0_9 = arith.constant 0 : index
    %c0_10 = arith.constant 0 : index
    %17 = vector.load %arg5[%c0_9, %c0_10] : memref<128x128xbf16, #tpu.memory_space<vmem>>, vector<128x128xbf16>
    %cst_11 = arith.constant dense<0.000000e+00> : vector<16x128xf32>
    %18 = tpu.matmul %15, %17, %cst_11 {dimension_numbers = #tpu.dot_dimension_numbers<[1], [0], [0], [1], [0, 0, 1, 1], [], []>} : vector<16x128xbf16>, vector<128x128xbf16>, vector<16x128xf32> -> vector<16x128xf32>
    %19 = arith.addf %16, %18 : vector<16x128xf32>
    %c0_12 = arith.constant 0 : index
    %c0_13 = arith.constant 0 : index
    %20 = vector.load %arg8[%c0_12, %c0_13] : memref<16x128xf32, #tpu.memory_space<vmem>>, vector<16x128xf32>
    tpu.vector_store %arg8[%c0_12, %c0_13], %19 {strides = array<i32>} : memref<16x128xf32, #tpu.memory_space<vmem>>, vector<16x128xf32>,
    %c0_i32_14 = arith.constant 0 : i32
    %21 = arith.cmpi eq, %arg1, %c0_i32_14 : i32
    %22 = arith.extui %21 : i1 to i32
    %c0_i32_15 = arith.constant 0 : i32
    %23 = arith.cmpi ne, %22, %c0_i32_15 : i32
    scf.if %23 {
      %c0_16 = arith.constant 0 : index
      %c0_17 = arith.constant 0 : index
      %24 = vector.load %arg8[%c0_16, %c0_17] : memref<16x128xf32, #tpu.memory_space<vmem>>, vector<16x128xf32>
      %c0_18 = arith.constant 0 : index
      %c0_19 = arith.constant 0 : index
      %25 = vector.load %arg6[%c0_18, %c0_19] : memref<1x128xf32, #tpu.memory_space<vmem>>, vector<1x128xf32>
      %26 = vector.broadcast %25 : vector<1x128xf32> to vector<16x128xf32>
      %27 = arith.addf %24, %26 : vector<16x128xf32>
      %c0_20 = arith.constant 0 : index
      %c0_21 = arith.constant 0 : index
      %28 = vector.load %arg7[%c0_20, %c0_21] : memref<16x128xf32, #tpu.memory_space<vmem>>, vector<16x128xf32>
      tpu.vector_store %arg7[%c0_20, %c0_21], %27 {strides = array<i32>} : memref<16x128xf32, #tpu.memory_space<vmem>>, vector<16x128xf32>,
    } else {
    }
    return
  }
  func.func @transform_0(%arg0: i32, %arg1: i32) -> (i32, i32) {
    %c0_i32 = arith.constant 0 : i32
    %c0_i32_0 = arith.constant 0 : i32
    return %arg0, %c0_i32 : i32, i32
  }
  func.func @transform_1(%arg0: i32, %arg1: i32) -> (i32, i32) {
    %c0_i32 = arith.constant 0 : i32
    %c0_i32_0 = arith.constant 0 : i32
    return %c0_i32, %arg1 : i32, i32
  }
  func.func @transform_2(%arg0: i32, %arg1: i32) -> (i32, i32) {
    %c0_i32 = arith.constant 0 : i32
    %c0_i32_0 = arith.constant 0 : i32
    return %c0_i32, %arg1 : i32, i32
  }
  func.func @transform_3(%arg0: i32, %arg1: i32) -> (i32, i32) {
    %c0_i32 = arith.constant 0 : i32
    %c0_i32_0 = arith.constant 0 : i32
    return %arg1, %c0_i32 : i32, i32
  }
  func.func @transform_4(%arg0: i32, %arg1: i32) -> (i32, i32) {
    %c0_i32 = arith.constant 0 : i32
    %c0_i32_0 = arith.constant 0 : i32
    %c0_i32_1 = arith.constant 0 : i32
    return %c0_i32, %c0_i32_0 : i32, i32
  }
  func.func @transform_5(%arg0: i32, %arg1: i32) -> (i32, i32) {
    %c0_i32 = arith.constant 0 : i32
    %c0_i32_0 = arith.constant 0 : i32
    return %arg0, %c0_i32 : i32, i32
  }
}

</mosaic_0001>

<llo_original>
// kernel: tpu_custom_call.1
$region0: #{tpu_custom_call.1}
  #allocation0 [shape = 'u32[]', space=smem, size = 0x4, offset = 0x4, fixed_abs, tag = 'smem constant byte address 0x4 - core index']
  #allocation1 [shape = 'u32[144,128]{1,0:T(1,128)}', space=vmem, size = 0x12000, scoped, tag = 'internal scratch']
  #allocation2 [shape = 'f32[16,128]{1,0:T(8,128)}', space=vmem, size = 0x2000, scoped, tag = 'scratch operand']
  %s0 = inlined_call_operand.hbm [shape: bf16[16,128], index: 0, kind: input, shape index: {}]
  %s1 = inlined_call_operand.hbm [shape: bf16[128,128], index: 1, kind: input, shape index: {}]
  %s2 = inlined_call_operand.vmem [shape: f32[1,128], index: 2, kind: input, shape index: {}]
  %s3 = inlined_call_operand.hbm [shape: bf16[128,128], index: 3, kind: input, shape index: {}]
  %s4 = inlined_call_operand.vmem [shape: f32[1,128], index: 4, kind: input, shape index: {}]
  %s5 = inlined_call_operand.hbm [shape: f32[16,128], index: 5, kind: output, shape index: {}]
  %s6 = sld [smem:[#allocation0]]
  $region50: #{tpu_custom_call.1} parent=0
    _
  %s8 = ssub.s32 1, %s6
  %s9 = scalar_select 0, %s8, %s6
  $region1: #{tpu_custom_call.1} parent=0
    #allocation3 [shape = 'u8[4096]{0}', space=vmem, size = 0x1000, scoped, tag = 'input window, operand 0, single buffered']
    #allocation4 [shape = 's32[1]{0}', space=sflag, size = 0x4, scoped, tag = 'scoped memory for tpu_custom_call.1']
    #allocation5 [shape = 's32[1]{0}', space=sflag, size = 0x4, scoped, tag = 'scoped memory for tpu_custom_call.1']
    #allocation6 [shape = 'u8[32768]{0}', space=vmem, size = 0x8000, scoped, tag = 'input window, operand 1, single buffered']
    #allocation7 [shape = 's32[1]{0}', space=sflag, size = 0x4, scoped, tag = 'scoped memory for tpu_custom_call.1']
    #allocation8 [shape = 'u8[32768]{0}', space=vmem, size = 0x8000, scoped, tag = 'input window, operand 3, single buffered']
    #allocation9 [shape = 'u8[8192]{0}', space=vmem, size = 0x2000, scoped, tag = 'output window, operand 0, single buffered']
    %10 = vsyncpa [#allocation4], 0
    %11 = vsyncpa [#allocation7], 0
    %12 = vsyncpa [#allocation5], 0
    // Predicated region
    $region2: #{tpu_custom_call.1} parent=1 // pred_check
      _
    $region3: #{tpu_custom_call.1} parent=1 // pred_check_branch
      %14 = sbr.rel (0) target = $region5
    $region4: #{tpu_custom_call.1} parent=1 // pred_region
      %s16 = ssub.s32 128, 128
      %17 = vsyncadd [#allocation4], %s16
      %s18 = sshll.u32 [#allocation3], 4
      %s19 = int_to_ptr.vmem [resolvable:$true] %s18
      %24 = dma.hbm_to_vmem [thread:$0]  %s0, 128, %s19, [#allocation4], 64, 64, 4
    $region5: #{tpu_custom_call.1} parent=1 // pred_fallthru
      _
    // Predicated region
    $region6: #{tpu_custom_call.1} parent=1 // pred_check
      _
    $region7: #{tpu_custom_call.1} parent=1 // pred_check_branch
      %26 = sbr.rel (0) target = $region9
    $region8: #{tpu_custom_call.1} parent=1 // pred_region
      %s28 = ssub.s32 1024, 1024
      %29 = vsyncadd [#allocation7], %s28
      %s30 = sshll.u32 [#allocation6], 4
      %s31 = int_to_ptr.vmem [resolvable:$true] %s30
      %36 = dma.hbm_to_vmem [thread:$0]  %s1, 1024, %s31, [#allocation7], 64, 64, 4
    $region9: #{tpu_custom_call.1} parent=1 // pred_fallthru
      _
    // Predicated region
    $region10: #{tpu_custom_call.1} parent=1 // pred_check
      _
    $region11: #{tpu_custom_call.1} parent=1 // pred_check_branch
      %38 = sbr.rel (0) target = $region13
    $region12: #{tpu_custom_call.1} parent=1 // pred_region
      _
    $region13: #{tpu_custom_call.1} parent=1 // pred_fallthru
      _
    // Predicated region
    $region14: #{tpu_custom_call.1} parent=1 // pred_check
      _
    $region15: #{tpu_custom_call.1} parent=1 // pred_check_branch
      %40 = sbr.rel (0) target = $region17
    $region16: #{tpu_custom_call.1} parent=1 // pred_region
      %s42 = ssub.s32 1024, 1024
      %43 = vsyncadd [#allocation7], %s42
      %s44 = sshll.u32 [#allocation8], 4
      %s45 = int_to_ptr.vmem [resolvable:$true] %s44
      %50 = dma.hbm_to_vmem [thread:$0]  %s3, 1024, %s45, [#allocation7], 64, 64, 4
    $region17: #{tpu_custom_call.1} parent=1 // pred_fallthru
      _
    // Predicated region
    $region18: #{tpu_custom_call.1} parent=1 // pred_check
      _
    $region19: #{tpu_custom_call.1} parent=1 // pred_check_branch
      %52 = sbr.rel (0) target = $region21
    $region20: #{tpu_custom_call.1} parent=1 // pred_region
      _
    $region21: #{tpu_custom_call.1} parent=1 // pred_fallthru
      _
    // Predicated region
    $region22: #{tpu_custom_call.1} parent=1 // pred_check
      _
    $region23: #{tpu_custom_call.1} parent=1 // pred_check_branch
      %54 = sbr.rel (0) target = $region25
    $region24: #{tpu_custom_call.1} parent=1 // pred_region
      %55 = dma.done [#allocation4], 128
    $region25: #{tpu_custom_call.1} parent=1 // pred_fallthru
      _
    // Predicated region
    $region26: #{tpu_custom_call.1} parent=1 // pred_check
      _
    $region27: #{tpu_custom_call.1} parent=1 // pred_check_branch
      %57 = sbr.rel (0) target = $region29
    $region28: #{tpu_custom_call.1} parent=1 // pred_region
      %58 = dma.done [#allocation7], 1024
    $region29: #{tpu_custom_call.1} parent=1 // pred_fallthru
      _
    // Predicated region
    $region30: #{tpu_custom_call.1} parent=1 // pred_check
      _
    $region31: #{tpu_custom_call.1} parent=1 // pred_check_branch
      %60 = sbr.rel (0) target = $region33
    $region32: #{tpu_custom_call.1} parent=1 // pred_region
      %61 = dma.done [#allocation7], 1024
    $region33: #{tpu_custom_call.1} parent=1 // pred_fallthru
      _
    %p63 = scmp.eq.s32.totalorder 0, 0
    // Predicated region
    $region34: #{tpu_custom_call.1} parent=1 // pred_check
      %p64 = pneg %p63
    $region35: #{tpu_custom_call.1} parent=1 // pred_check_branch
      %66 = sbr.rel (%p64) target = $region37
    $region36: #{tpu_custom_call.1} parent=1 // pred_region
      %67 = vst [vmem:[#allocation2] sm:$0xff] 0.0
      %68 = vst [vmem:[#allocation2 + $0x8] sm:$0xff] 0.0
    $region37: #{tpu_custom_call.1} parent=1 // pred_fallthru
      _
    %v69 = vld [vmem:[#allocation3] sm:$0xf]
    %v70 = vld [vmem:[#allocation3 + $0x4] sm:$0xf]
    %v71 = vld [vmem:[#allocation6] sm:$0xf]
    %v72 = vld [vmem:[#allocation6 + $0x4] sm:$0xf]
    %v73 = vld [vmem:[#allocation6 + $0x8] sm:$0xf]
    %v74 = vld [vmem:[#allocation6 + $0xc] sm:$0xf]
    %v75 = vld [vmem:[#allocation6 + $0x10] sm:$0xf]
    %v76 = vld [vmem:[#allocation6 + $0x14] sm:$0xf]
    %v77 = vld [vmem:[#allocation6 + $0x18] sm:$0xf]
    %v78 = vld [vmem:[#allocation6 + $0x1c] sm:$0xf]
    %v79 = vld [vmem:[#allocation6 + $0x20] sm:$0xf]
    %v80 = vld [vmem:[#allocation6 + $0x24] sm:$0xf]
    %v81 = vld [vmem:[#allocation6 + $0x28] sm:$0xf]
    %v82 = vld [vmem:[#allocation6 + $0x2c] sm:$0xf]
    %v83 = vld [vmem:[#allocation6 + $0x30] sm:$0xf]
    %v84 = vld [vmem:[#allocation6 + $0x34] sm:$0xf]
    %v85 = vld [vmem:[#allocation6 + $0x38] sm:$0xf]
    %v86 = vld [vmem:[#allocation6 + $0x3c] sm:$0xf]
    %v87 = vld [vmem:[%s2] sm:$0x1]
    %v89 = vlaneseq
    %v90 = vshrl.u32 %v89, 7
    %v91 = vsub.s32 0, %v90
    %v92 = vrot.slane %v87, %v91
    %v96 = vunpack.c.l.b16 %v69
    %v97 = vunpack.c.l.b16 %v70
    %v98 = vpack.c.b16 %v97, %v96
    %v116 = vunpack.c.l.b16 %v71
    %v117 = vunpack.c.l.b16 %v72
    %v118 = vunpack.c.l.b16 %v73
    %v119 = vunpack.c.l.b16 %v74
    %v120 = vunpack.c.l.b16 %v75
    %v121 = vunpack.c.l.b16 %v76
    %v122 = vunpack.c.l.b16 %v77
    %v123 = vunpack.c.l.b16 %v78
    %v124 = vunpack.c.l.b16 %v79
    %v125 = vunpack.c.l.b16 %v80
    %v126 = vunpack.c.l.b16 %v81
    %v127 = vunpack.c.l.b16 %v82
    %v128 = vunpack.c.l.b16 %v83
    %v129 = vunpack.c.l.b16 %v84
    %v130 = vunpack.c.l.b16 %v85
    %v131 = vunpack.c.l.b16 %v86
    %v132 = vpack.c.b16 %v117, %v116
    %v133 = vpack.c.b16 %v119, %v118
    %v134 = vpack.c.b16 %v121, %v120
    %v135 = vpack.c.b16 %v123, %v122
    %v136 = vpack.c.b16 %v125, %v124
    %v137 = vpack.c.b16 %v127, %v126
    %v138 = vpack.c.b16 %v129, %v128
    %v139 = vpack.c.b16 %v131, %v130
    %148 = vmatprep.subr.bf16.mxu0 0
    %149 = vmatpush1.bf16.msra.mxu0 %v139
    %150 = vmatprep.subr.bf16.mxu0 0
    %151 = vmatpush1.bf16.msra.mxu0 %v138
    %152 = vmatprep.subr.bf16.mxu0 0
    %153 = vmatpush1.bf16.msra.mxu0 %v137
    %154 = vmatprep.subr.bf16.mxu0 0
    %155 = vmatpush1.bf16.msra.mxu0 %v136
    %156 = vmatprep.subr.bf16.mxu0 0
    %157 = vmatpush1.bf16.msra.mxu0 %v135
    %158 = vmatprep.subr.bf16.mxu0 0
    %159 = vmatpush1.bf16.msra.mxu0 %v134
    %160 = vmatprep.subr.bf16.mxu0 0
    %161 = vmatpush1.bf16.msra.mxu0 %v133
    %162 = vmatprep.subr.bf16.mxu0 0
    %163 = vmatpush1.bf16.msra.mxu0 %v132
    %164 = vmatprep.subr.bf16.mxu0 0
    %165 = vmatpush2.bf16.msra.mxu0 0
    %166 = vmatprep.subr.bf16.mxu0 0
    %167 = vmatpush2.bf16.msra.mxu0 0
    %168 = vmatprep.subr.bf16.mxu0 0
    %169 = vmatpush2.bf16.msra.mxu0 0
    %170 = vmatprep.subr.bf16.mxu0 0
    %171 = vmatpush2.bf16.msra.mxu0 0
    %172 = vmatprep.subr.bf16.mxu0 0
    %173 = vmatpush2.bf16.msra.mxu0 0
    %174 = vmatprep.subr.bf16.mxu0 0
    %175 = vmatpush2.bf16.msra.mxu0 0
    %176 = vmatprep.subr.bf16.mxu0 0
    %177 = vmatpush2.bf16.msra.mxu0 0
    %178 = vmatprep.subr.bf16.mxu0 0
    %179 = vmatpush2.bf16.msra.mxu0 0
    %180 = vmatprep.mubr.bf16.mxu0 0
    %181 = vmatmul.mubr.bf16.gmra.mxu0 %v98
    %v182 = vpop.f32.mrf.mxu0
    %v183 = vadd.f32 %v92, %v182
    %v184 = vpop.f32.mrf.mxu0
    %v185 = vpop.f32.mrf.mxu0
    %v186 = vadd.f32 %v92, %v185
    %v187 = vpop.f32.mrf.mxu0
    %188 = vdwg.mxu0
    %v189 = vxor.u32 %v183, 2147483648
    %v190 = vxor.u32 %v186, 2147483648
    %v191 = vmul.f32 %v189, 1.442695
    %v192 = vpow.pop %v191
    %v193 = vmul.f32 %v190, 1.442695
    %v194 = vpow.pop %v193
    %v195 = vadd.f32 %v192, 1.0
    %v196 = vadd.f32 %v194, 1.0
    %v197 = vrcp.pop %v195
    %v198 = vmul.f32 1.0, %v197
    %v199 = vrcp.pop %v196
    %v200 = vmul.f32 1.0, %v199
    %v201 = vmul.f32 %v183, %v198
    %v202 = vmul.f32 %v186, %v200
    %v203 = vpack.c.bf16 %v202, %v201
    %v204 = vld [vmem:[#allocation2] sm:$0xff]
    %v205 = vld [vmem:[#allocation2 + $0x8] sm:$0xff]
    %v206 = vld [vmem:[#allocation8] sm:$0xf]
    %v207 = vld [vmem:[#allocation8 + $0x4] sm:$0xf]
    %v208 = vld [vmem:[#allocation8 + $0x8] sm:$0xf]
    %v209 = vld [vmem:[#allocation8 + $0xc] sm:$0xf]
    %v210 = vld [vmem:[#allocation8 + $0x10] sm:$0xf]
    %v211 = vld [vmem:[#allocation8 + $0x14] sm:$0xf]
    %v212 = vld [vmem:[#allocation8 + $0x18] sm:$0xf]
    %v213 = vld [vmem:[#allocation8 + $0x1c] sm:$0xf]
    %v214 = vld [vmem:[#allocation8 + $0x20] sm:$0xf]
    %v215 = vld [vmem:[#allocation8 + $0x24] sm:$0xf]
    %v216 = vld [vmem:[#allocation8 + $0x28] sm:$0xf]
    %v217 = vld [vmem:[#allocation8 + $0x2c] sm:$0xf]
    %v218 = vld [vmem:[#allocation8 + $0x30] sm:$0xf]
    %v219 = vld [vmem:[#allocation8 + $0x34] sm:$0xf]
    %v220 = vld [vmem:[#allocation8 + $0x38] sm:$0xf]
    %v221 = vld [vmem:[#allocation8 + $0x3c] sm:$0xf]
    %v238 = vunpack.c.l.b16 %v206
    %v239 = vunpack.c.l.b16 %v207
    %v240 = vunpack.c.l.b16 %v208
    %v241 = vunpack.c.l.b16 %v209
    %v242 = vunpack.c.l.b16 %v210
    %v243 = vunpack.c.l.b16 %v211
    %v244 = vunpack.c.l.b16 %v212
    %v245 = vunpack.c.l.b16 %v213
    %v246 = vunpack.c.l.b16 %v214
    %v247 = vunpack.c.l.b16 %v215
    %v248 = vunpack.c.l.b16 %v216
    %v249 = vunpack.c.l.b16 %v217
    %v250 = vunpack.c.l.b16 %v218
    %v251 = vunpack.c.l.b16 %v219
    %v252 = vunpack.c.l.b16 %v220
    %v253 = vunpack.c.l.b16 %v221
    %v254 = vpack.c.b16 %v239, %v238
    %v255 = vpack.c.b16 %v241, %v240
    %v256 = vpack.c.b16 %v243, %v242
    %v257 = vpack.c.b16 %v245, %v244
    %v258 = vpack.c.b16 %v247, %v246
    %v259 = vpack.c.b16 %v249, %v248
    %v260 = vpack.c.b16 %v251, %v250
    %v261 = vpack.c.b16 %v253, %v252
    %270 = vmatprep.subr.bf16.mxu0 0
    %271 = vmatpush1.bf16.msra.mxu0 %v261
    %272 = vmatprep.subr.bf16.mxu0 0
    %273 = vmatpush1.bf16.msra.mxu0 %v260
    %274 = vmatprep.subr.bf16.mxu0 0
    %275 = vmatpush1.bf16.msra.mxu0 %v259
    %276 = vmatprep.subr.bf16.mxu0 0
    %277 = vmatpush1.bf16.msra.mxu0 %v258
    %278 = vmatprep.subr.bf16.mxu0 0
    %279 = vmatpush1.bf16.msra.mxu0 %v257
    %280 = vmatprep.subr.bf16.mxu0 0
    %281 = vmatpush1.bf16.msra.mxu0 %v256
    %282 = vmatprep.subr.bf16.mxu0 0
    %283 = vmatpush1.bf16.msra.mxu0 %v255
    %284 = vmatprep.subr.bf16.mxu0 0
    %285 = vmatpush1.bf16.msra.mxu0 %v254
    %286 = vmatprep.subr.bf16.mxu0 0
    %287 = vmatpush2.bf16.msra.mxu0 0
    %288 = vmatprep.subr.bf16.mxu0 0
    %289 = vmatpush2.bf16.msra.mxu0 0
    %290 = vmatprep.subr.bf16.mxu0 0
    %291 = vmatpush2.bf16.msra.mxu0 0
    %292 = vmatprep.subr.bf16.mxu0 0
    %293 = vmatpush2.bf16.msra.mxu0 0
    %294 = vmatprep.subr.bf16.mxu0 0
    %295 = vmatpush2.bf16.msra.mxu0 0
    %296 = vmatprep.subr.bf16.mxu0 0
    %297 = vmatpush2.bf16.msra.mxu0 0
    %298 = vmatprep.subr.bf16.mxu0 0
    %299 = vmatpush2.bf16.msra.mxu0 0
    %300 = vmatprep.subr.bf16.mxu0 0
    %301 = vmatpush2.bf16.msra.mxu0 0
    %302 = vmatprep.mubr.bf16.mxu0 0
    %303 = vmatmul.mubr.bf16.gmra.mxu0 %v203
    %v304 = vpop.f32.mrf.mxu0
    %v305 = vadd.f32 0.0, %v304
    %v306 = vpop.f32.mrf.mxu0
    %v307 = vpop.f32.mrf.mxu0
    %v308 = vadd.f32 0.0, %v307
    %v309 = vpop.f32.mrf.mxu0
    %310 = vdwg.mxu0
    %v311 = vadd.f32 %v204, %v305
    %v312 = vadd.f32 %v205, %v308
    %313 = vst [vmem:[#allocation2] sm:$0xff] %v311
    %314 = vst [vmem:[#allocation2 + $0x8] sm:$0xff] %v312
    // Predicated region
    $region38: #{tpu_custom_call.1} parent=1 // pred_check
      %p315 = pneg %p63
    $region39: #{tpu_custom_call.1} parent=1 // pred_check_branch
      %317 = sbr.rel (%p315) target = $region41
    $region40: #{tpu_custom_call.1} parent=1 // pred_region
      %v318 = vld [vmem:[#allocation2] sm:$0xff]
      %v319 = vld [vmem:[#allocation2 + $0x8] sm:$0xff]
      %v320 = vld [vmem:[%s4] sm:$0x1]
      %v322 = vlaneseq
      %v323 = vshrl.u32 %v322, 7
      %v324 = vsub.s32 0, %v323
      %v325 = vrot.slane %v320, %v324
      %v327 = vadd.f32 %v318, %v325
      %v328 = vadd.f32 %v319, %v325
      %329 = vst [vmem:[#allocation9] sm:$0xff] %v327
      %330 = vst [vmem:[#allocation9 + $0x8] sm:$0xff] %v328
    $region41: #{tpu_custom_call.1} parent=1 // pred_fallthru
      _
    // Predicated region
    $region42: #{tpu_custom_call.1} parent=1 // pred_check
      _
    $region43: #{tpu_custom_call.1} parent=1 // pred_check_branch
      %332 = sbr.rel (0) target = $region45
    $region44: #{tpu_custom_call.1} parent=1 // pred_region
      %s334 = ssub.s32 256, 256
      %335 = vsyncadd [#allocation5], %s334
      %s336 = sshll.u32 [#allocation9], 4
      %s337 = int_to_ptr.vmem [resolvable:$true] %s336
      %342 = dma.vmem_to_hbm [thread:$0]  %s337, 256, %s5, [#allocation5], 128, 128, 8
    $region45: #{tpu_custom_call.1} parent=1 // pred_fallthru
      _
    // Predicated region
    $region46: #{tpu_custom_call.1} parent=1 // pred_check
      _
    $region47: #{tpu_custom_call.1} parent=1 // pred_check_branch
      %344 = sbr.rel (0) target = $region49
    $region48: #{tpu_custom_call.1} parent=1 // pred_region
      %345 = dma.done [#allocation5], 256
    $region49: #{tpu_custom_call.1} parent=1 // pred_fallthru
      _
    %346 = vsyncpa [#allocation4], 1
    %347 = vsyncpa [#allocation7], 1
    %348 = vsyncpa [#allocation5], 1

// kernel: tpu_custom_call.1
$region0: #{tpu_custom_call.1}
  #allocation0 [shape = 'u32[]', space=smem, size = 0x4, offset = 0x4, fixed_abs, tag = 'smem constant byte address 0x4 - core index']
  #allocation1 [shape = 'u32[144,128]{1,0:T(1,128)}', space=vmem, size = 0x12000, scoped, tag = 'internal scratch']
  #allocation2 [shape = 'f32[16,128]{1,0:T(8,128)}', space=vmem, size = 0x2000, scoped, tag = 'scratch operand']
  %s0 = inlined_call_operand.hbm [shape: bf16[16,128], index: 0, kind: input, shape index: {}]
  %s1 = inlined_call_operand.hbm [shape: bf16[128,128], index: 1, kind: input, shape index: {}]
  %s2 = inlined_call_operand.vmem [shape: f32[1,128], index: 2, kind: input, shape index: {}]
  %s3 = inlined_call_operand.hbm [shape: bf16[128,128], index: 3, kind: input, shape index: {}]
  %s4 = inlined_call_operand.vmem [shape: f32[1,128], index: 4, kind: input, shape index: {}]
  %s5 = inlined_call_operand.hbm [shape: f32[16,128], index: 5, kind: output, shape index: {}]
  %s6 = sld [smem:[#allocation0]]
  $region50: #{tpu_custom_call.1} parent=0
    _
  %s8 = ssub.s32 1, %s6
  %s9 = scalar_select 0, %s8, %s6
  $region1: #{tpu_custom_call.1} parent=0
    #allocation3 [shape = 'u8[4096]{0}', space=vmem, size = 0x1000, scoped, tag = 'input window, operand 0, single buffered']
    #allocation4 [shape = 's32[1]{0}', space=sflag, size = 0x4, scoped, tag = 'scoped memory for tpu_custom_call.1']
    #allocation5 [shape = 's32[1]{0}', space=sflag, size = 0x4, scoped, tag = 'scoped memory for tpu_custom_call.1']
    #allocation6 [shape = 'u8[32768]{0}', space=vmem, size = 0x8000, scoped, tag = 'input window, operand 1, single buffered']
    #allocation7 [shape = 's32[1]{0}', space=sflag, size = 0x4, scoped, tag = 'scoped memory for tpu_custom_call.1']
    #allocation8 [shape = 'u8[32768]{0}', space=vmem, size = 0x8000, scoped, tag = 'input window, operand 3, single buffered']
    #allocation9 [shape = 'u8[8192]{0}', space=vmem, size = 0x2000, scoped, tag = 'output window, operand 0, single buffered']
    %10 = vsyncpa [#allocation4], 0
    %11 = vsyncpa [#allocation7], 0
    %12 = vsyncpa [#allocation5], 0
    // Predicated region
    $region2: #{tpu_custom_call.1} parent=1 // pred_check
      _
    $region3: #{tpu_custom_call.1} parent=1 // pred_check_branch
      %14 = sbr.rel (0) target = $region5
    $region4: #{tpu_custom_call.1} parent=1 // pred_region
      %s16 = ssub.s32 128, 128
      %17 = vsyncadd [#allocation4], %s16
      %s18 = sshll.u32 [#allocation3], 4
      %s19 = int_to_ptr.vmem [resolvable:$true] %s18
      %24 = dma.hbm_to_vmem [thread:$0]  %s0, 128, %s19, [#allocation4], 64, 64, 4
    $region5: #{tpu_custom_call.1} parent=1 // pred_fallthru
      _
    // Predicated region
    $region6: #{tpu_custom_call.1} parent=1 // pred_check
      _
    $region7: #{tpu_custom_call.1} parent=1 // pred_check_branch
      %26 = sbr.rel (0) target = $region9
    $region8: #{tpu_custom_call.1} parent=1 // pred_region
      %s28 = ssub.s32 1024, 1024
      %29 = vsyncadd [#allocation7], %s28
      %s30 = sshll.u32 [#allocation6], 4
      %s31 = int_to_ptr.vmem [resolvable:$true] %s30
      %36 = dma.hbm_to_vmem [thread:$0]  %s1, 1024, %s31, [#allocation7], 64, 64, 4
    $region9: #{tpu_custom_call.1} parent=1 // pred_fallthru
      _
    // Predicated region
    $region10: #{tpu_custom_call.1} parent=1 // pred_check
      _
    $region11: #{tpu_custom_call.1} parent=1 // pred_check_branch
      %38 = sbr.rel (0) target = $region13
    $region12: #{tpu_custom_call.1} parent=1 // pred_region
      _
    $region13: #{tpu_custom_call.1} parent=1 // pred_fallthru
      _
    // Predicated region
    $region14: #{tpu_custom_call.1} parent=1 // pred_check
      _
    $region15: #{tpu_custom_call.1} parent=1 // pred_check_branch
      %40 = sbr.rel (0) target = $region17
    $region16: #{tpu_custom_call.1} parent=1 // pred_region
      %s42 = ssub.s32 1024, 1024
      %43 = vsyncadd [#allocation7], %s42
      %s44 = sshll.u32 [#allocation8], 4
      %s45 = int_to_ptr.vmem [resolvable:$true] %s44
      %50 = dma.hbm_to_vmem [thread:$0]  %s3, 1024, %s45, [#allocation7], 64, 64, 4
    $region17: #{tpu_custom_call.1} parent=1 // pred_fallthru
      _
    // Predicated region
    $region18: #{tpu_custom_call.1} parent=1 // pred_check
      _
    $region19: #{tpu_custom_call.1} parent=1 // pred_check_branch
      %52 = sbr.rel (0) target = $region21
    $region20: #{tpu_custom_call.1} parent=1 // pred_region
      _
    $region21: #{tpu_custom_call.1} parent=1 // pred_fallthru
      _
    // Predicated region
    $region22: #{tpu_custom_call.1} parent=1 // pred_check
      _
    $region23: #{tpu_custom_call.1} parent=1 // pred_check_branch
      %54 = sbr.rel (0) target = $region25
    $region24: #{tpu_custom_call.1} parent=1 // pred_region
      %55 = dma.done [#allocation4], 128
    $region25: #{tpu_custom_call.1} parent=1 // pred_fallthru
      _
    // Predicated region
    $region26: #{tpu_custom_call.1} parent=1 // pred_check
      _
    $region27: #{tpu_custom_call.1} parent=1 // pred_check_branch
      %57 = sbr.rel (0) target = $region29
    $region28: #{tpu_custom_call.1} parent=1 // pred_region
      %58 = dma.done [#allocation7], 1024
    $region29: #{tpu_custom_call.1} parent=1 // pred_fallthru
      _
    // Predicated region
    $region30: #{tpu_custom_call.1} parent=1 // pred_check
      _
    $region31: #{tpu_custom_call.1} parent=1 // pred_check_branch
      %60 = sbr.rel (0) target = $region33
    $region32: #{tpu_custom_call.1} parent=1 // pred_region
      %61 = dma.done [#allocation7], 1024
    $region33: #{tpu_custom_call.1} parent=1 // pred_fallthru
      _
    %p63 = scmp.eq.s32.totalorder 0, 0
    // Predicated region
    $region34: #{tpu_custom_call.1} parent=1 // pred_check
      %p64 = pneg %p63
    $region35: #{tpu_custom_call.1} parent=1 // pred_check_branch
      %66 = sbr.rel (%p64) target = $region37
    $region36: #{tpu_custom_call.1} parent=1 // pred_region
      %67 = vst [vmem:[#allocation2] sm:$0xff] 0.0
      %68 = vst [vmem:[#allocation2 + $0x8] sm:$0xff] 0.0
    $region37: #{tpu_custom_call.1} parent=1 // pred_fallthru
      _
    %v69 = vld [vmem:[#allocation3] sm:$0xf]
    %v70 = vld [vmem:[#allocation3 + $0x4] sm:$0xf]
    %v71 = vld [vmem:[#allocation6] sm:$0xf]
    %v72 = vld [vmem:[#allocation6 + $0x4] sm:$0xf]
    %v73 = vld [vmem:[#allocation6 + $0x8] sm:$0xf]
    %v74 = vld [vmem:[#allocation6 + $0xc] sm:$0xf]
    %v75 = vld [vmem:[#allocation6 + $0x10] sm:$0xf]
    %v76 = vld [vmem:[#allocation6 + $0x14] sm:$0xf]
    %v77 = vld [vmem:[#allocation6 + $0x18] sm:$0xf]
    %v78 = vld [vmem:[#allocation6 + $0x1c] sm:$0xf]
    %v79 = vld [vmem:[#allocation6 + $0x20] sm:$0xf]
    %v80 = vld [vmem:[#allocation6 + $0x24] sm:$0xf]
    %v81 = vld [vmem:[#allocation6 + $0x28] sm:$0xf]
    %v82 = vld [vmem:[#allocation6 + $0x2c] sm:$0xf]
    %v83 = vld [vmem:[#allocation6 + $0x30] sm:$0xf]
    %v84 = vld [vmem:[#allocation6 + $0x34] sm:$0xf]
    %v85 = vld [vmem:[#allocation6 + $0x38] sm:$0xf]
    %v86 = vld [vmem:[#allocation6 + $0x3c] sm:$0xf]
    %v87 = vld [vmem:[%s2] sm:$0x1]
    %v89 = vlaneseq
    %v90 = vshrl.u32 %v89, 7
    %v91 = vsub.s32 0, %v90
    %v92 = vrot.slane %v87, %v91
    %v96 = vunpack.c.l.b16 %v69
    %v97 = vunpack.c.l.b16 %v70
    %v98 = vpack.c.b16 %v97, %v96
    %v116 = vunpack.c.l.b16 %v71
    %v117 = vunpack.c.l.b16 %v72
    %v118 = vunpack.c.l.b16 %v73
    %v119 = vunpack.c.l.b16 %v74
    %v120 = vunpack.c.l.b16 %v75
    %v121 = vunpack.c.l.b16 %v76
    %v122 = vunpack.c.l.b16 %v77
    %v123 = vunpack.c.l.b16 %v78
    %v124 = vunpack.c.l.b16 %v79
    %v125 = vunpack.c.l.b16 %v80
    %v126 = vunpack.c.l.b16 %v81
    %v127 = vunpack.c.l.b16 %v82
    %v128 = vunpack.c.l.b16 %v83
    %v129 = vunpack.c.l.b16 %v84
    %v130 = vunpack.c.l.b16 %v85
    %v131 = vunpack.c.l.b16 %v86
    %v132 = vpack.c.b16 %v117, %v116
    %v133 = vpack.c.b16 %v119, %v118
    %v134 = vpack.c.b16 %v121, %v120
    %v135 = vpack.c.b16 %v123, %v122
    %v136 = vpack.c.b16 %v125, %v124
    %v137 = vpack.c.b16 %v127, %v126
    %v138 = vpack.c.b16 %v129, %v128
    %v139 = vpack.c.b16 %v131, %v130
    %148 = vmatprep.subr.bf16.mxu0 0
    %149 = vmatpush1.bf16.msra.mxu0 %v139
    %150 = vmatprep.subr.bf16.mxu0 0
    %151 = vmatpush1.bf16.msra.mxu0 %v138
    %152 = vmatprep.subr.bf16.mxu0 0
    %153 = vmatpush1.bf16.msra.mxu0 %v137
    %154 = vmatprep.subr.bf16.mxu0 0
    %155 = vmatpush1.bf16.msra.mxu0 %v136
    %156 = vmatprep.subr.bf16.mxu0 0
    %157 = vmatpush1.bf16.msra.mxu0 %v135
    %158 = vmatprep.subr.bf16.mxu0 0
    %159 = vmatpush1.bf16.msra.mxu0 %v134
    %160 = vmatprep.subr.bf16.mxu0 0
    %161 = vmatpush1.bf16.msra.mxu0 %v133
    %162 = vmatprep.subr.bf16.mxu0 0
    %163 = vmatpush1.bf16.msra.mxu0 %v132
    %164 = vmatprep.subr.bf16.mxu0 0
    %165 = vmatpush2.bf16.msra.mxu0 0
    %166 = vmatprep.subr.bf16.mxu0 0
    %167 = vmatpush2.bf16.msra.mxu0 0
    %168 = vmatprep.subr.bf16.mxu0 0
    %169 = vmatpush2.bf16.msra.mxu0 0
    %170 = vmatprep.subr.bf16.mxu0 0
    %171 = vmatpush2.bf16.msra.mxu0 0
    %172 = vmatprep.subr.bf16.mxu0 0
    %173 = vmatpush2.bf16.msra.mxu0 0
    %174 = vmatprep.subr.bf16.mxu0 0
    %175 = vmatpush2.bf16.msra.mxu0 0
    %176 = vmatprep.subr.bf16.mxu0 0
    %177 = vmatpush2.bf16.msra.mxu0 0
    %178 = vmatprep.subr.bf16.mxu0 0
    %179 = vmatpush2.bf16.msra.mxu0 0
    %180 = vmatprep.mubr.bf16.mxu0 0
    %181 = vmatmul.mubr.bf16.gmra.mxu0 %v98
    %v182 = vpop.f32.mrf.mxu0
    %v183 = vadd.f32 %v92, %v182
    %v184 = vpop.f32.mrf.mxu0
    %v185 = vpop.f32.mrf.mxu0
    %v186 = vadd.f32 %v92, %v185
    %v187 = vpop.f32.mrf.mxu0
    %188 = vdwg.mxu0
    %v189 = vxor.u32 %v183, 2147483648
    %v190 = vxor.u32 %v186, 2147483648
    %v191 = vmul.f32 %v189, 1.442695
    %v192 = vpow.pop %v191
    %v193 = vmul.f32 %v190, 1.442695
    %v194 = vpow.pop %v193
    %v195 = vadd.f32 %v192, 1.0
    %v196 = vadd.f32 %v194, 1.0
    %v197 = vrcp.pop %v195
    %v198 = vmul.f32 1.0, %v197
    %v199 = vrcp.pop %v196
    %v200 = vmul.f32 1.0, %v199
    %v201 = vmul.f32 %v183, %v198
    %v202 = vmul.f32 %v186, %v200
    %v203 = vpack.c.bf16 %v202, %v201
    %v204 = vld [vmem:[#allocation2] sm:$0xff]
    %v205 = vld [vmem:[#allocation2 + $0x8] sm:$0xff]
    %v206 = vld [vmem:[#allocation8] sm:$0xf]
    %v207 = vld [vmem:[#allocation8 + $0x4] sm:$0xf]
    %v208 = vld [vmem:[#allocation8 + $0x8] sm:$0xf]
    %v209 = vld [vmem:[#allocation8 + $0xc] sm:$0xf]
    %v210 = vld [vmem:[#allocation8 + $0x10] sm:$0xf]
    %v211 = vld [vmem:[#allocation8 + $0x14] sm:$0xf]
    %v212 = vld [vmem:[#allocation8 + $0x18] sm:$0xf]
    %v213 = vld [vmem:[#allocation8 + $0x1c] sm:$0xf]
    %v214 = vld [vmem:[#allocation8 + $0x20] sm:$0xf]
    %v215 = vld [vmem:[#allocation8 + $0x24] sm:$0xf]
    %v216 = vld [vmem:[#allocation8 + $0x28] sm:$0xf]
    %v217 = vld [vmem:[#allocation8 + $0x2c] sm:$0xf]
    %v218 = vld [vmem:[#allocation8 + $0x30] sm:$0xf]
    %v219 = vld [vmem:[#allocation8 + $0x34] sm:$0xf]
    %v220 = vld [vmem:[#allocation8 + $0x38] sm:$0xf]
    %v221 = vld [vmem:[#allocation8 + $0x3c] sm:$0xf]
    %v238 = vunpack.c.l.b16 %v206
    %v239 = vunpack.c.l.b16 %v207
    %v240 = vunpack.c.l.b16 %v208
    %v241 = vunpack.c.l.b16 %v209
    %v242 = vunpack.c.l.b16 %v210
    %v243 = vunpack.c.l.b16 %v211
    %v244 = vunpack.c.l.b16 %v212
    %v245 = vunpack.c.l.b16 %v213
    %v246 = vunpack.c.l.b16 %v214
    %v247 = vunpack.c.l.b16 %v215
    %v248 = vunpack.c.l.b16 %v216
    %v249 = vunpack.c.l.b16 %v217
    %v250 = vunpack.c.l.b16 %v218
    %v251 = vunpack.c.l.b16 %v219
    %v252 = vunpack.c.l.b16 %v220
    %v253 = vunpack.c.l.b16 %v221
    %v254 = vpack.c.b16 %v239, %v238
    %v255 = vpack.c.b16 %v241, %v240
    %v256 = vpack.c.b16 %v243, %v242
    %v257 = vpack.c.b16 %v245, %v244
    %v258 = vpack.c.b16 %v247, %v246
    %v259 = vpack.c.b16 %v249, %v248
    %v260 = vpack.c.b16 %v251, %v250
    %v261 = vpack.c.b16 %v253, %v252
    %270 = vmatprep.subr.bf16.mxu0 0
    %271 = vmatpush1.bf16.msra.mxu0 %v261
    %272 = vmatprep.subr.bf16.mxu0 0
    %273 = vmatpush1.bf16.msra.mxu0 %v260
    %274 = vmatprep.subr.bf16.mxu0 0
    %275 = vmatpush1.bf16.msra.mxu0 %v259
    %276 = vmatprep.subr.bf16.mxu0 0
    %277 = vmatpush1.bf16.msra.mxu0 %v258
    %278 = vmatprep.subr.bf16.mxu0 0
    %279 = vmatpush1.bf16.msra.mxu0 %v257
    %280 = vmatprep.subr.bf16.mxu0 0
    %281 = vmatpush1.bf16.msra.mxu0 %v256
    %282 = vmatprep.subr.bf16.mxu0 0
    %283 = vmatpush1.bf16.msra.mxu0 %v255
    %284 = vmatprep.subr.bf16.mxu0 0
    %285 = vmatpush1.bf16.msra.mxu0 %v254
    %286 = vmatprep.subr.bf16.mxu0 0
    %287 = vmatpush2.bf16.msra.mxu0 0
    %288 = vmatprep.subr.bf16.mxu0 0
    %289 = vmatpush2.bf16.msra.mxu0 0
    %290 = vmatprep.subr.bf16.mxu0 0
    %291 = vmatpush2.bf16.msra.mxu0 0
    %292 = vmatprep.subr.bf16.mxu0 0
    %293 = vmatpush2.bf16.msra.mxu0 0
    %294 = vmatprep.subr.bf16.mxu0 0
    %295 = vmatpush2.bf16.msra.mxu0 0
    %296 = vmatprep.subr.bf16.mxu0 0
    %297 = vmatpush2.bf16.msra.mxu0 0
    %298 = vmatprep.subr.bf16.mxu0 0
    %299 = vmatpush2.bf16.msra.mxu0 0
    %300 = vmatprep.subr.bf16.mxu0 0
    %301 = vmatpush2.bf16.msra.mxu0 0
    %302 = vmatprep.mubr.bf16.mxu0 0
    %303 = vmatmul.mubr.bf16.gmra.mxu0 %v203
    %v304 = vpop.f32.mrf.mxu0
    %v305 = vadd.f32 0.0, %v304
    %v306 = vpop.f32.mrf.mxu0
    %v307 = vpop.f32.mrf.mxu0
    %v308 = vadd.f32 0.0, %v307
    %v309 = vpop.f32.mrf.mxu0
    %310 = vdwg.mxu0
    %v311 = vadd.f32 %v204, %v305
    %v312 = vadd.f32 %v205, %v308
    %313 = vst [vmem:[#allocation2] sm:$0xff] %v311
    %314 = vst [vmem:[#allocation2 + $0x8] sm:$0xff] %v312
    // Predicated region
    $region38: #{tpu_custom_call.1} parent=1 // pred_check
      %p315 = pneg %p63
    $region39: #{tpu_custom_call.1} parent=1 // pred_check_branch
      %317 = sbr.rel (%p315) target = $region41
    $region40: #{tpu_custom_call.1} parent=1 // pred_region
      %v318 = vld [vmem:[#allocation2] sm:$0xff]
      %v319 = vld [vmem:[#allocation2 + $0x8] sm:$0xff]
      %v320 = vld [vmem:[%s4] sm:$0x1]
      %v322 = vlaneseq
      %v323 = vshrl.u32 %v322, 7
      %v324 = vsub.s32 0, %v323
      %v325 = vrot.slane %v320, %v324
      %v327 = vadd.f32 %v318, %v325
      %v328 = vadd.f32 %v319, %v325
      %329 = vst [vmem:[#allocation9] sm:$0xff] %v327
      %330 = vst [vmem:[#allocation9 + $0x8] sm:$0xff] %v328
    $region41: #{tpu_custom_call.1} parent=1 // pred_fallthru
      _
    // Predicated region
    $region42: #{tpu_custom_call.1} parent=1 // pred_check
      _
    $region43: #{tpu_custom_call.1} parent=1 // pred_check_branch
      %332 = sbr.rel (0) target = $region45
    $region44: #{tpu_custom_call.1} parent=1 // pred_region
      %s334 = ssub.s32 256, 256
      %335 = vsyncadd [#allocation5], %s334
      %s336 = sshll.u32 [#allocation9], 4
      %s337 = int_to_ptr.vmem [resolvable:$true] %s336
      %342 = dma.vmem_to_hbm [thread:$0]  %s337, 256, %s5, [#allocation5], 128, 128, 8
    $region45: #{tpu_custom_call.1} parent=1 // pred_fallthru
      _
    // Predicated region
    $region46: #{tpu_custom_call.1} parent=1 // pred_check
      _
    $region47: #{tpu_custom_call.1} parent=1 // pred_check_branch
      %344 = sbr.rel (0) target = $region49
    $region48: #{tpu_custom_call.1} parent=1 // pred_region
      %345 = dma.done [#allocation5], 256
    $region49: #{tpu_custom_call.1} parent=1 // pred_fallthru
      _
    %346 = vsyncpa [#allocation4], 1
    %347 = vsyncpa [#allocation7], 1
    %348 = vsyncpa [#allocation5], 1

</llo_original>
